<compile_context>
chip_gen: v6e
topology: v6e:2x2x1
jax: 0.10.0
libtpu: 0.0.40
codegen_flags: <defaults>
</compile_context>

<pallas_src>
import jax
import jax.numpy as jnp
from jax.experimental import pallas as pl
from jax.experimental.pallas import tpu as pltpu


# ----------------------------------------------------------------------------
# Fused kernel: sequence-mean pooling for q and a + both linear heads.
#   qx, ax : [Bt, S, H]
#   wq     : [H, Q]    bq : [1, Q]
#   waq    : [H, A]    waa: [H, A]    ba : [1, A]      (wa split at row H)
# Outputs (per batch tile):
#   q_mean : [Bt, H]   a_mean : [Bt, H]
#   q_res  : [Bt, Q]   a_res  : [Bt, A]
# ----------------------------------------------------------------------------
def fused_pool_head_kernel(qx_ref, ax_ref, wq_ref, bq_ref, waq_ref, waa_ref,
                           ba_ref, qmean_ref, amean_ref, qres_ref, ares_ref):
    # Upcast before the reduction (keeps bf16 inputs correct on v5e, identity
    # for f32) and accumulate everything in f32.
    q_mean = jnp.mean(qx_ref[...].astype(jnp.float32), axis=1)   # [Bt, H]
    a_mean = jnp.mean(ax_ref[...].astype(jnp.float32), axis=1)   # [Bt, H]

    # q_linear(q)    (dropout == identity in eval mode)
    q_res = jnp.dot(q_mean, wq_ref[...].astype(jnp.float32),
                    preferred_element_type=jnp.float32) + bq_ref[...]

    # a_linear(cat([q, a])) == q @ wa[:H] + a @ wa[H:]  -> no lane concat
    a_res = (jnp.dot(q_mean, waq_ref[...].astype(jnp.float32),
                     preferred_element_type=jnp.float32)
             + jnp.dot(a_mean, waa_ref[...].astype(jnp.float32),
                       preferred_element_type=jnp.float32)
             + ba_ref[...])

    qmean_ref[...] = q_mean.astype(qmean_ref.dtype)
    amean_ref[...] = a_mean.astype(amean_ref.dtype)
    qres_ref[...] = q_res.astype(qres_ref.dtype)
    ares_ref[...] = a_res.astype(ares_ref.dtype)


def _choose_batch_block(B, S, H, itemsize, vmem_budget=20 * 1024 * 1024):
    """Pick a batch tile that (a) is sublane-legal (multiple of 8 or the full
    batch), (b) fits the two double-buffered [Bt,S,H] hidden inputs inside a
    conservative VMEM budget (safe on v7x's 64 MiB VMEM), and (c) leaves >= 2
    grid steps when possible so v7x's two TensorCores are both used."""
    if B % 8 != 0:
        return B                             # tiny/odd batch: full-extent block
    per_row = 2 * 2 * S * H * itemsize       # 2 hidden inputs x double buffering
    max_rows = max(8, vmem_budget // per_row)
    bt = 8
    while (bt * 2 <= max_rows) and (B % (bt * 2) == 0) and (B // (bt * 2) >= 2):
        bt *= 2
    return min(bt, B)


def bert_pool_and_heads(q_hidden, a_hidden, wq, bq, wa, ba):
    B, S, H = q_hidden.shape
    Q = wq.shape[1]
    A = wa.shape[1]
    bt = _choose_batch_block(B, S, H, q_hidden.dtype.itemsize)
    grid = (B // bt,)

    # Split a_linear's weight outside the kernel (free slice) so the kernel
    # never builds a [Bt, 2H] concatenated temporary.
    wa_q = wa[:H]   # [H, A]
    wa_a = wa[H:]   # [H, A]

    q_mean, a_mean, q_res, a_res = pl.pallas_call(
        fused_pool_head_kernel,
        out_shape=(
            jax.ShapeDtypeStruct((B, H), jnp.float32),
            jax.ShapeDtypeStruct((B, H), jnp.float32),
            jax.ShapeDtypeStruct((B, Q), jnp.float32),
            jax.ShapeDtypeStruct((B, A), jnp.float32),
        ),
        grid=grid,
        in_specs=[
            pl.BlockSpec((bt, S, H), lambda b: (b, 0, 0)),   # q_hidden tile
            pl.BlockSpec((bt, S, H), lambda b: (b, 0, 0)),   # a_hidden tile
            pl.BlockSpec((H, Q), lambda b: (0, 0)),          # wq (resident)
            pl.BlockSpec((1, Q), lambda b: (0, 0)),          # bq
            pl.BlockSpec((H, A), lambda b: (0, 0)),          # wa[:H]
            pl.BlockSpec((H, A), lambda b: (0, 0)),          # wa[H:]
            pl.BlockSpec((1, A), lambda b: (0, 0)),          # ba
        ],
        out_specs=(
            pl.BlockSpec((bt, H), lambda b: (b, 0)),
            pl.BlockSpec((bt, H), lambda b: (b, 0)),
            pl.BlockSpec((bt, Q), lambda b: (b, 0)),
            pl.BlockSpec((bt, A), lambda b: (b, 0)),
        ),
        compiler_params=pltpu.CompilerParams(
            dimension_semantics=("parallel",),
            vmem_limit_bytes=48 * 1024 * 1024,
        ),
    )(q_hidden, a_hidden, wq, bq, wa_q, wa_a, ba)

    # Final lane concatenations are done by XLA (cheap), matching the module's
    # two return values exactly — nothing is computed twice or discarded.
    result = jnp.concatenate([q_res, a_res], axis=1)          # [B, Q + A]
    hidden_cat = jnp.concatenate([q_mean, a_mean], axis=1)    # [B, 2H]
    return result, hidden_cat


# ----------------------------------------------------------------------------
# Deterministic stand-in "pretrained model" (glue, plain JAX):
# token + segment + position embedding, masked, tanh.
# Returns last_hidden_state [B, S, H]  (== oup[0] in the reference).
# ----------------------------------------------------------------------------
def standin_encoder(params, ids, mask, seg):
    tok = params["tok_emb"][ids]                       # [B, S, H]
    sg = params["seg_emb"][seg]                        # [B, S, H]
    pos = params["pos_emb"][None, : ids.shape[1], :]   # [1, S, H]
    h = jnp.tanh(tok + sg + pos)
    return h * mask[..., None].astype(h.dtype)         # [B, S, H]


# ----------------------------------------------------------------------------
# Full forward (mirrors Bert_v1_0.forward, dropout in eval mode)
# ----------------------------------------------------------------------------
def bert_v1_0_forward(params, q_id, q_mask, q_seg, a_id, a_mask, a_seg):
    q_hidden = standin_encoder(params, q_id, q_mask, q_seg)   # [B, S, H]
    a_hidden = standin_encoder(params, a_id, a_mask, a_seg)   # [B, S, H]
    return bert_pool_and_heads(
        q_hidden, a_hidden,
        params["wq"], params["bq"], params["wa"], params["ba"],
    )


# Pure-JAX reference (for correctness check only).
def reference_forward(params, q_id, q_mask, q_seg, a_id, a_mask, a_seg):
    q_hidden = standin_encoder(params, q_id, q_mask, q_seg)
    a_hidden = standin_encoder(params, a_id, a_mask, a_seg)
    q_mean = jnp.mean(q_hidden, axis=1)
    a_mean = jnp.mean(a_hidden, axis=1)
    q_res = q_mean @ params["wq"] + params["bq"]
    a_res = jnp.concatenate([q_mean, a_mean], axis=1) @ params["wa"] + params["ba"]
    return (jnp.concatenate([q_res, a_res], axis=1),
            jnp.concatenate([q_mean, a_mean], axis=1))


# ----------------------------------------------------------------------------
# Deterministic parameter init (nn.Linear-style uniform(-1/sqrt(in), 1/sqrt(in)))
# ----------------------------------------------------------------------------
def init_params(key, vocab, seq_len, hidden, num_q_target, num_a_target):
    keys = jax.random.split(key, 7)
    lim_q = 1.0 / jnp.sqrt(hidden)
    lim_a = 1.0 / jnp.sqrt(2 * hidden)
    return {
        "tok_emb": jax.random.normal(keys[0], (vocab, hidden), jnp.float32) * 0.02,
        "seg_emb": jax.random.normal(keys[1], (2, hidden), jnp.float32) * 0.02,
        "pos_emb": jax.random.normal(keys[2], (seq_len, hidden), jnp.float32) * 0.02,
        "wq": jax.random.uniform(keys[3], (hidden, num_q_target), jnp.float32, -lim_q, lim_q),
        "bq": jax.random.uniform(keys[4], (1, num_q_target), jnp.float32, -lim_q, lim_q),
        "wa": jax.random.uniform(keys[5], (2 * hidden, num_a_target), jnp.float32, -lim_a, lim_a),
        "ba": jax.random.uniform(keys[6], (1, num_a_target), jnp.float32, -lim_a, lim_a),
    }


if __name__ == "__main__":
    B, S, H = 16, 8, 32          # small stand-in for (batch, seq_len, 768)
    VOCAB = 50
    NUM_Q_TARGET, NUM_A_TARGET = 21, 9

    key = jax.random.PRNGKey(0)
    k_param, k_qid, k_aid, k_qseg, k_aseg = jax.random.split(key, 5)

    params = init_params(k_param, VOCAB, S, H, NUM_Q_TARGET, NUM_A_TARGET)

    q_id = jax.random.randint(k_qid, (B, S), 0, VOCAB, dtype=jnp.int32)
    a_id = jax.random.randint(k_aid, (B, S), 0, VOCAB, dtype=jnp.int32)
    q_seg = jax.random.randint(k_qseg, (B, S), 0, 2, dtype=jnp.int32)
    a_seg = jax.random.randint(k_aseg, (B, S), 0, 2, dtype=jnp.int32)
    q_mask = jnp.ones((B, S), dtype=jnp.float32)
    a_mask = jnp.ones((B, S), dtype=jnp.float32)

    result, hidden_cat = jax.jit(bert_v1_0_forward)(
        params, q_id, q_mask, q_seg, a_id, a_mask, a_seg
    )
    jax.block_until_ready((result, hidden_cat))

    ref_result, ref_hidden = reference_forward(
        params, q_id, q_mask, q_seg, a_id, a_mask, a_seg
    )

    assert result.shape == (B, NUM_Q_TARGET + NUM_A_TARGET)
    assert hidden_cat.shape == (B, 2 * H)
    assert jnp.allclose(result, ref_result, atol=2e-2, rtol=2e-2)
    assert jnp.allclose(hidden_cat, ref_hidden, atol=2e-2, rtol=2e-2)
    print("KERNEL_OK")
</pallas_src>

<mosaic_0001>
module attributes {stable_mosaic.version = 11 : i64} {
  func.func @fused_pool_head_kernel(%arg0: i32, %arg1: memref<8x8x32xf32, #tpu.memory_space<vmem>>, %arg2: memref<8x8x32xf32, #tpu.memory_space<vmem>>, %arg3: memref<32x21xf32, #tpu.memory_space<vmem>>, %arg4: memref<1x21xf32, #tpu.memory_space<vmem>>, %arg5: memref<32x9xf32, #tpu.memory_space<vmem>>, %arg6: memref<32x9xf32, #tpu.memory_space<vmem>>, %arg7: memref<1x9xf32, #tpu.memory_space<vmem>>, %arg8: memref<8x32xf32, #tpu.memory_space<vmem>>, %arg9: memref<8x32xf32, #tpu.memory_space<vmem>>, %arg10: memref<8x21xf32, #tpu.memory_space<vmem>>, %arg11: memref<8x9xf32, #tpu.memory_space<vmem>>) attributes {dimension_semantics = [#tpu.dimension_semantics<parallel>], iteration_bounds = array<i64: 2>, scalar_prefetch = 0 : i64, scratch_operands = 0 : i64, tpu.core_type = #tpu.core_type<tc>, window_params = [{transform_indices = @transform_0, window_bounds = array<i64: 8, 8, 32>}, {transform_indices = @transform_1, window_bounds = array<i64: 8, 8, 32>}, {pipeline_mode = #tpu.pipeline_mode<synchronous>, transform_indices = @transform_2, window_bounds = array<i64: 32, 21>}, {pipeline_mode = #tpu.pipeline_mode<synchronous>, transform_indices = @transform_3, window_bounds = array<i64: 1, 21>}, {pipeline_mode = #tpu.pipeline_mode<synchronous>, transform_indices = @transform_4, window_bounds = array<i64: 32, 9>}, {pipeline_mode = #tpu.pipeline_mode<synchronous>, transform_indices = @transform_5, window_bounds = array<i64: 32, 9>}, {pipeline_mode = #tpu.pipeline_mode<synchronous>, transform_indices = @transform_6, window_bounds = array<i64: 1, 9>}, {transform_indices = @transform_7, window_bounds = array<i64: 8, 32>}, {transform_indices = @transform_8, window_bounds = array<i64: 8, 32>}, {transform_indices = @transform_9, window_bounds = array<i64: 8, 21>}, {transform_indices = @transform_10, window_bounds = array<i64: 8, 9>}]} {
    %c0 = arith.constant 0 : index
    %c0_0 = arith.constant 0 : index
    %c0_1 = arith.constant 0 : index
    %0 = vector.load %arg1[%c0, %c0_0, %c0_1] : memref<8x8x32xf32, #tpu.memory_space<vmem>>, vector<8x8x32xf32>
    %cst = arith.constant dense<0.000000e+00> : vector<8x32xf32>
    %1 = vector.multi_reduction <add>, %0, %cst [1] : vector<8x8x32xf32> to vector<8x32xf32>
    %cst_2 = arith.constant 8.000000e+00 : f32
    %2 = vector.broadcast %cst_2 : f32 to vector<8x32xf32>
    %3 = arith.divf %1, %2 : vector<8x32xf32>
    %c0_3 = arith.constant 0 : index
    %c0_4 = arith.constant 0 : index
    %c0_5 = arith.constant 0 : index
    %4 = vector.load %arg2[%c0_3, %c0_4, %c0_5] : memref<8x8x32xf32, #tpu.memory_space<vmem>>, vector<8x8x32xf32>
    %cst_6 = arith.constant dense<0.000000e+00> : vector<8x32xf32>
    %5 = vector.multi_reduction <add>, %4, %cst_6 [1] : vector<8x8x32xf32> to vector<8x32xf32>
    %cst_7 = arith.constant 8.000000e+00 : f32
    %6 = vector.broadcast %cst_7 : f32 to vector<8x32xf32>
    %7 = arith.divf %5, %6 : vector<8x32xf32>
    %c0_8 = arith.constant 0 : index
    %c0_9 = arith.constant 0 : index
    %8 = vector.load %arg3[%c0_8, %c0_9] : memref<32x21xf32, #tpu.memory_space<vmem>>, vector<32x21xf32>
    %cst_10 = arith.constant dense<0.000000e+00> : vector<8x21xf32>
    %9 = tpu.matmul %3, %8, %cst_10 {dimension_numbers = #tpu.dot_dimension_numbers<[1], [0], [0], [1], [0, 0, 1, 1], [], []>} : vector<8x32xf32>, vector<32x21xf32>, vector<8x21xf32> -> vector<8x21xf32>
    %c0_11 = arith.constant 0 : index
    %c0_12 = arith.constant 0 : index
    %10 = vector.load %arg4[%c0_11, %c0_12] : memref<1x21xf32, #tpu.memory_space<vmem>>, vector<1x21xf32>
    %11 = vector.broadcast %10 : vector<1x21xf32> to vector<8x21xf32>
    %12 = arith.addf %9, %11 : vector<8x21xf32>
    %c0_13 = arith.constant 0 : index
    %c0_14 = arith.constant 0 : index
    %13 = vector.load %arg5[%c0_13, %c0_14] : memref<32x9xf32, #tpu.memory_space<vmem>>, vector<32x9xf32>
    %cst_15 = arith.constant dense<0.000000e+00> : vector<8x9xf32>
    %14 = tpu.matmul %3, %13, %cst_15 {dimension_numbers = #tpu.dot_dimension_numbers<[1], [0], [0], [1], [0, 0, 1, 1], [], []>} : vector<8x32xf32>, vector<32x9xf32>, vector<8x9xf32> -> vector<8x9xf32>
    %c0_16 = arith.constant 0 : index
    %c0_17 = arith.constant 0 : index
    %15 = vector.load %arg6[%c0_16, %c0_17] : memref<32x9xf32, #tpu.memory_space<vmem>>, vector<32x9xf32>
    %cst_18 = arith.constant dense<0.000000e+00> : vector<8x9xf32>
    %16 = tpu.matmul %7, %15, %cst_18 {dimension_numbers = #tpu.dot_dimension_numbers<[1], [0], [0], [1], [0, 0, 1, 1], [], []>} : vector<8x32xf32>, vector<32x9xf32>, vector<8x9xf32> -> vector<8x9xf32>
    %17 = arith.addf %14, %16 : vector<8x9xf32>
    %c0_19 = arith.constant 0 : index
    %c0_20 = arith.constant 0 : index
    %18 = vector.load %arg7[%c0_19, %c0_20] : memref<1x9xf32, #tpu.memory_space<vmem>>, vector<1x9xf32>
    %19 = vector.broadcast %18 : vector<1x9xf32> to vector<8x9xf32>
    %20 = arith.addf %17, %19 : vector<8x9xf32>
    %c0_21 = arith.constant 0 : index
    %c0_22 = arith.constant 0 : index
    %21 = vector.load %arg8[%c0_21, %c0_22] : memref<8x32xf32, #tpu.memory_space<vmem>>, vector<8x32xf32>
    tpu.vector_store %arg8[%c0_21, %c0_22], %3 {strides = array<i32>} : memref<8x32xf32, #tpu.memory_space<vmem>>, vector<8x32xf32>,
    %c0_23 = arith.constant 0 : index
    %c0_24 = arith.constant 0 : index
    %22 = vector.load %arg9[%c0_23, %c0_24] : memref<8x32xf32, #tpu.memory_space<vmem>>, vector<8x32xf32>
    tpu.vector_store %arg9[%c0_23, %c0_24], %7 {strides = array<i32>} : memref<8x32xf32, #tpu.memory_space<vmem>>, vector<8x32xf32>,
    %c0_25 = arith.constant 0 : index
    %c0_26 = arith.constant 0 : index
    %23 = vector.load %arg10[%c0_25, %c0_26] : memref<8x21xf32, #tpu.memory_space<vmem>>, vector<8x21xf32>
    tpu.vector_store %arg10[%c0_25, %c0_26], %12 {strides = array<i32>} : memref<8x21xf32, #tpu.memory_space<vmem>>, vector<8x21xf32>,
    %c0_27 = arith.constant 0 : index
    %c0_28 = arith.constant 0 : index
    %24 = vector.load %arg11[%c0_27, %c0_28] : memref<8x9xf32, #tpu.memory_space<vmem>>, vector<8x9xf32>
    tpu.vector_store %arg11[%c0_27, %c0_28], %20 {strides = array<i32>} : memref<8x9xf32, #tpu.memory_space<vmem>>, vector<8x9xf32>,
    return
  }
  func.func @transform_0(%arg0: i32) -> (i32, i32, i32) {
    %c0_i32 = arith.constant 0 : i32
    %c0_i32_0 = arith.constant 0 : i32
    %c0_i32_1 = arith.constant 0 : i32
    return %arg0, %c0_i32, %c0_i32_0 : i32, i32, i32
  }
  func.func @transform_1(%arg0: i32) -> (i32, i32, i32) {
    %c0_i32 = arith.constant 0 : i32
    %c0_i32_0 = arith.constant 0 : i32
    %c0_i32_1 = arith.constant 0 : i32
    return %arg0, %c0_i32, %c0_i32_0 : i32, i32, i32
  }
  func.func @transform_2(%arg0: i32) -> (i32, i32) {
    %c0_i32 = arith.constant 0 : i32
    %c0_i32_0 = arith.constant 0 : i32
    %c0_i32_1 = arith.constant 0 : i32
    return %c0_i32, %c0_i32_0 : i32, i32
  }
  func.func @transform_3(%arg0: i32) -> (i32, i32) {
    %c0_i32 = arith.constant 0 : i32
    %c0_i32_0 = arith.constant 0 : i32
    %c0_i32_1 = arith.constant 0 : i32
    return %c0_i32, %c0_i32_0 : i32, i32
  }
  func.func @transform_4(%arg0: i32) -> (i32, i32) {
    %c0_i32 = arith.constant 0 : i32
    %c0_i32_0 = arith.constant 0 : i32
    %c0_i32_1 = arith.constant 0 : i32
    return %c0_i32, %c0_i32_0 : i32, i32
  }
  func.func @transform_5(%arg0: i32) -> (i32, i32) {
    %c0_i32 = arith.constant 0 : i32
    %c0_i32_0 = arith.constant 0 : i32
    %c0_i32_1 = arith.constant 0 : i32
    return %c0_i32, %c0_i32_0 : i32, i32
  }
  func.func @transform_6(%arg0: i32) -> (i32, i32) {
    %c0_i32 = arith.constant 0 : i32
    %c0_i32_0 = arith.constant 0 : i32
    %c0_i32_1 = arith.constant 0 : i32
    return %c0_i32, %c0_i32_0 : i32, i32
  }
  func.func @transform_7(%arg0: i32) -> (i32, i32) {
    %c0_i32 = arith.constant 0 : i32
    %c0_i32_0 = arith.constant 0 : i32
    return %arg0, %c0_i32 : i32, i32
  }
  func.func @transform_8(%arg0: i32) -> (i32, i32) {
    %c0_i32 = arith.constant 0 : i32
    %c0_i32_0 = arith.constant 0 : i32
    return %arg0, %c0_i32 : i32, i32
  }
  func.func @transform_9(%arg0: i32) -> (i32, i32) {
    %c0_i32 = arith.constant 0 : i32
    %c0_i32_0 = arith.constant 0 : i32
    return %arg0, %c0_i32 : i32, i32
  }
  func.func @transform_10(%arg0: i32) -> (i32, i32) {
    %c0_i32 = arith.constant 0 : i32
    %c0_i32_0 = arith.constant 0 : i32
    return %arg0, %c0_i32 : i32, i32
  }
}

</mosaic_0001>

<llo_original>
// kernel: bert_v1_0_forward.1
$region0: #{bert_v1_0_forward.1}
  #allocation0 [shape = 'u32[]', space=smem, size = 0x4, offset = 0x4, fixed_abs, tag = 'smem constant byte address 0x4 - core index']
  #allocation1 [shape = 'u32[144,128]{1,0:T(1,128)}', space=vmem, size = 0x12000, scoped, tag = 'internal scratch']
  %s0 = inlined_call_operand.vmem [shape: f32[16,8,32], index: 0, kind: input, shape index: {}]
  %s1 = inlined_call_operand.vmem [shape: f32[16,8,32], index: 1, kind: input, shape index: {}]
  %s2 = inlined_call_operand.vmem [shape: f32[32,21], index: 2, kind: input, shape index: {}]
  %s3 = inlined_call_operand.vmem [shape: f32[1,21], index: 3, kind: input, shape index: {}]
  %s4 = inlined_call_operand.vmem [shape: f32[32,9], index: 4, kind: input, shape index: {}]
  %s5 = inlined_call_operand.vmem [shape: f32[32,9], index: 5, kind: input, shape index: {}]
  %s6 = inlined_call_operand.vmem [shape: f32[1,9], index: 6, kind: input, shape index: {}]
  %s7 = inlined_call_operand.vmem [shape: f32[16,32], index: 7, kind: output, shape index: {0}]
  %s8 = inlined_call_operand.vmem [shape: f32[16,32], index: 8, kind: output, shape index: {1}]
  %s9 = inlined_call_operand.vmem [shape: f32[16,21], index: 9, kind: output, shape index: {2}]
  %s10 = inlined_call_operand.vmem [shape: f32[16,9], index: 10, kind: output, shape index: {3}]
  %11 = xla_tuple %s7, %s8, %s9, %s10
  %s12 = sld [smem:[#allocation0]]
  $region85: #{bert_v1_0_forward.1} parent=0
    _
  %s14 = ssub.s32 1, %s12
  %s15 = scalar_select 0, %s14, %s12
  loop: start=0, step=1, limit=4
  $region2: #{bert_v1_0_forward.1} parent=0 // loop_pre_header
    _
  $region3: #{bert_v1_0_forward.1} parent=0 // loop_header
    %s17 = sphi 0, %s21
    %p18 = scmp.ge.s32.totalorder %s17, 4
    %s27 = sphi 0, %s29
    %s30 = sphi 0, %s27
    %s31 = sphi 0, %s30
    %s47 = sphi 0, %s31
    %s53 = sphi 0, %s55
    %s56 = sphi 0, %s53
    %s57 = sphi 0, %s56
    %s73 = sphi 0, %s57
    %s77 = sphi 0, %s77
    %s79 = sphi 0, %s77
    %s80 = sphi 0, %s79
    %s94 = sphi 0, %s80
    %s98 = sphi 0, %s98
    %s100 = sphi 0, %s98
    %s101 = sphi 0, %s100
    %s115 = sphi 0, %s101
    %s119 = sphi 0, %s119
    %s121 = sphi 0, %s119
    %s122 = sphi 0, %s121
    %s136 = sphi 0, %s122
    %s140 = sphi 0, %s140
    %s142 = sphi 0, %s140
    %s143 = sphi 0, %s142
    %s157 = sphi 0, %s143
    %s161 = sphi 0, %s161
    %s163 = sphi 0, %s161
    %s164 = sphi 0, %s163
    %s178 = sphi 0, %s164
    %s184 = sphi 0, %s186
    %s187 = sphi 0, %s184
    %s188 = sphi 0, %s187
    %s204 = sphi 0, %s188
    %s210 = sphi 0, %s212
    %s213 = sphi 0, %s210
    %s214 = sphi 0, %s213
    %s230 = sphi 0, %s214
    %s236 = sphi 0, %s238
    %s239 = sphi 0, %s236
    %s240 = sphi 0, %s239
    %s256 = sphi 0, %s240
    %s262 = sphi 0, %s264
    %s265 = sphi 0, %s262
    %s266 = sphi 0, %s265
    %s282 = sphi 0, %s266
  $region4: #{bert_v1_0_forward.1} parent=0 // loop_header_branch
    %20 = sbr.rel (%p18) target = $region8
  $region5: #{bert_v1_0_forward.1} parent=0 // loop_body
    %s22 = ssub.s32 %s17, 1
    %s23 = ssub.s32 %s17, 2
    %s24 = sadd.s32 %s17, 1
    %s25 = ssub.s32 %s17, %s24
    %p26 = scmp.eq.s32.totalorder %s25, 0
    %s28 = sadd.s32 %s27, 1
    %s29 = scalar_select %p26, %s27, %s28
    %p32 = pneg %p26
    %p33 = scmp.eq.s32.totalorder %s17, 1
    %p34 = por %p32, %p33
    %p35 = scmp.ne.s32.totalorder %s27, %s30
    %p36 = scmp.eq.s32.totalorder %s17, 0
    %p37 = por %p35, %p36
    %p38 = scmp.ne.s32.totalorder %s27, %s30
    %p39 = scmp.eq.s32.totalorder %s22, 1
    %p40 = por %p38, %p39
    %p41 = scmp.ne.s32.totalorder %s30, %s31
    %p42 = scmp.eq.s32.totalorder %s22, 0
    %p43 = por %p41, %p42
    %p44 = scmp.ne.s32.totalorder %s30, %s31
    %p45 = scmp.eq.s32.totalorder %s23, 1
    %p46 = por %p44, %p45
    %p48 = scmp.ne.s32.totalorder %s31, %s47
    %p49 = scmp.eq.s32.totalorder %s23, 0
    %p50 = por %p48, %p49
    %s51 = ssub.s32 %s17, %s24
    %p52 = scmp.eq.s32.totalorder %s51, 0
    %s54 = sadd.s32 %s53, 1
    %s55 = scalar_select %p52, %s53, %s54
    %p58 = pneg %p52
    %p59 = scmp.eq.s32.totalorder %s17, 1
    %p60 = por %p58, %p59
    %p61 = scmp.ne.s32.totalorder %s53, %s56
    %p62 = scmp.eq.s32.totalorder %s17, 0
    %p63 = por %p61, %p62
    %p64 = scmp.ne.s32.totalorder %s53, %s56
    %p65 = scmp.eq.s32.totalorder %s22, 1
    %p66 = por %p64, %p65
    %p67 = scmp.ne.s32.totalorder %s56, %s57
    %p68 = scmp.eq.s32.totalorder %s22, 0
    %p69 = por %p67, %p68
    %p70 = scmp.ne.s32.totalorder %s56, %s57
    %p71 = scmp.eq.s32.totalorder %s23, 1
    %p72 = por %p70, %p71
    %p74 = scmp.ne.s32.totalorder %s57, %s73
    %p75 = scmp.eq.s32.totalorder %s23, 0
    %p76 = por %p74, %p75
    %s78 = sadd.s32 %s77, 1
    %p81 = scmp.eq.s32.totalorder %s17, 1
    %p82 = scmp.ne.s32.totalorder %s77, %s79
    %p83 = scmp.eq.s32.totalorder %s17, 0
    %p84 = por %p82, %p83
    %p85 = scmp.ne.s32.totalorder %s77, %s79
    %p86 = scmp.eq.s32.totalorder %s22, 1
    %p87 = por %p85, %p86
    %p88 = scmp.ne.s32.totalorder %s79, %s80
    %p89 = scmp.eq.s32.totalorder %s22, 0
    %p90 = por %p88, %p89
    %p91 = scmp.ne.s32.totalorder %s79, %s80
    %p92 = scmp.eq.s32.totalorder %s23, 1
    %p93 = por %p91, %p92
    %p95 = scmp.ne.s32.totalorder %s80, %s94
    %p96 = scmp.eq.s32.totalorder %s23, 0
    %p97 = por %p95, %p96
    %s99 = sadd.s32 %s98, 1
    %p102 = scmp.eq.s32.totalorder %s17, 1
    %p103 = scmp.ne.s32.totalorder %s98, %s100
    %p104 = scmp.eq.s32.totalorder %s17, 0
    %p105 = por %p103, %p104
    %p106 = scmp.ne.s32.totalorder %s98, %s100
    %p107 = scmp.eq.s32.totalorder %s22, 1
    %p108 = por %p106, %p107
    %p109 = scmp.ne.s32.totalorder %s100, %s101
    %p110 = scmp.eq.s32.totalorder %s22, 0
    %p111 = por %p109, %p110
    %p112 = scmp.ne.s32.totalorder %s100, %s101
    %p113 = scmp.eq.s32.totalorder %s23, 1
    %p114 = por %p112, %p113
    %p116 = scmp.ne.s32.totalorder %s101, %s115
    %p117 = scmp.eq.s32.totalorder %s23, 0
    %p118 = por %p116, %p117
    %s120 = sadd.s32 %s119, 1
    %p123 = scmp.eq.s32.totalorder %s17, 1
    %p124 = scmp.ne.s32.totalorder %s119, %s121
    %p125 = scmp.eq.s32.totalorder %s17, 0
    %p126 = por %p124, %p125
    %p127 = scmp.ne.s32.totalorder %s119, %s121
    %p128 = scmp.eq.s32.totalorder %s22, 1
    %p129 = por %p127, %p128
    %p130 = scmp.ne.s32.totalorder %s121, %s122
    %p131 = scmp.eq.s32.totalorder %s22, 0
    %p132 = por %p130, %p131
    %p133 = scmp.ne.s32.totalorder %s121, %s122
    %p134 = scmp.eq.s32.totalorder %s23, 1
    %p135 = por %p133, %p134
    %p137 = scmp.ne.s32.totalorder %s122, %s136
    %p138 = scmp.eq.s32.totalorder %s23, 0
    %p139 = por %p137, %p138
    %s141 = sadd.s32 %s140, 1
    %p144 = scmp.eq.s32.totalorder %s17, 1
    %p145 = scmp.ne.s32.totalorder %s140, %s142
    %p146 = scmp.eq.s32.totalorder %s17, 0
    %p147 = por %p145, %p146
    %p148 = scmp.ne.s32.totalorder %s140, %s142
    %p149 = scmp.eq.s32.totalorder %s22, 1
    %p150 = por %p148, %p149
    %p151 = scmp.ne.s32.totalorder %s142, %s143
    %p152 = scmp.eq.s32.totalorder %s22, 0
    %p153 = por %p151, %p152
    %p154 = scmp.ne.s32.totalorder %s142, %s143
    %p155 = scmp.eq.s32.totalorder %s23, 1
    %p156 = por %p154, %p155
    %p158 = scmp.ne.s32.totalorder %s143, %s157
    %p159 = scmp.eq.s32.totalorder %s23, 0
    %p160 = por %p158, %p159
    %s162 = sadd.s32 %s161, 1
    %p165 = scmp.eq.s32.totalorder %s17, 1
    %p166 = scmp.ne.s32.totalorder %s161, %s163
    %p167 = scmp.eq.s32.totalorder %s17, 0
    %p168 = por %p166, %p167
    %p169 = scmp.ne.s32.totalorder %s161, %s163
    %p170 = scmp.eq.s32.totalorder %s22, 1
    %p171 = por %p169, %p170
    %p172 = scmp.ne.s32.totalorder %s163, %s164
    %p173 = scmp.eq.s32.totalorder %s22, 0
    %p174 = por %p172, %p173
    %p175 = scmp.ne.s32.totalorder %s163, %s164
    %p176 = scmp.eq.s32.totalorder %s23, 1
    %p177 = por %p175, %p176
    %p179 = scmp.ne.s32.totalorder %s164, %s178
    %p180 = scmp.eq.s32.totalorder %s23, 0
    %p181 = por %p179, %p180
    %s182 = ssub.s32 %s17, %s24
    %p183 = scmp.eq.s32.totalorder %s182, 0
    %s185 = sadd.s32 %s184, 1
    %s186 = scalar_select %p183, %s184, %s185
    %p189 = pneg %p183
    %p190 = scmp.eq.s32.totalorder %s17, 1
    %p191 = por %p189, %p190
    %p192 = scmp.ne.s32.totalorder %s184, %s187
    %p193 = scmp.eq.s32.totalorder %s17, 0
    %p194 = por %p192, %p193
    %p195 = scmp.ne.s32.totalorder %s184, %s187
    %p196 = scmp.eq.s32.totalorder %s22, 1
    %p197 = por %p195, %p196
    %p198 = scmp.ne.s32.totalorder %s187, %s188
    %p199 = scmp.eq.s32.totalorder %s22, 0
    %p200 = por %p198, %p199
    %p201 = scmp.ne.s32.totalorder %s187, %s188
    %p202 = scmp.eq.s32.totalorder %s23, 1
    %p203 = por %p201, %p202
    %p205 = scmp.ne.s32.totalorder %s188, %s204
    %p206 = scmp.eq.s32.totalorder %s23, 0
    %p207 = por %p205, %p206
    %s208 = ssub.s32 %s17, %s24
    %p209 = scmp.eq.s32.totalorder %s208, 0
    %s211 = sadd.s32 %s210, 1
    %s212 = scalar_select %p209, %s210, %s211
    %p215 = pneg %p209
    %p216 = scmp.eq.s32.totalorder %s17, 1
    %p217 = por %p215, %p216
    %p218 = scmp.ne.s32.totalorder %s210, %s213
    %p219 = scmp.eq.s32.totalorder %s17, 0
    %p220 = por %p218, %p219
    %p221 = scmp.ne.s32.totalorder %s210, %s213
    %p222 = scmp.eq.s32.totalorder %s22, 1
    %p223 = por %p221, %p222
    %p224 = scmp.ne.s32.totalorder %s213, %s214
    %p225 = scmp.eq.s32.totalorder %s22, 0
    %p226 = por %p224, %p225
    %p227 = scmp.ne.s32.totalorder %s213, %s214
    %p228 = scmp.eq.s32.totalorder %s23, 1
    %p229 = por %p227, %p228
    %p231 = scmp.ne.s32.totalorder %s214, %s230
    %p232 = scmp.eq.s32.totalorder %s23, 0
    %p233 = por %p231, %p232
    %s234 = ssub.s32 %s17, %s24
    %p235 = scmp.eq.s32.totalorder %s234, 0
    %s237 = sadd.s32 %s236, 1
    %s238 = scalar_select %p235, %s236, %s237
    %p241 = pneg %p235
    %p242 = scmp.eq.s32.totalorder %s17, 1
    %p243 = por %p241, %p242
    %p244 = scmp.ne.s32.totalorder %s236, %s239
    %p245 = scmp.eq.s32.totalorder %s17, 0
    %p246 = por %p244, %p245
    %p247 = scmp.ne.s32.totalorder %s236, %s239
    %p248 = scmp.eq.s32.totalorder %s22, 1
    %p249 = por %p247, %p248
    %p250 = scmp.ne.s32.totalorder %s239, %s240
    %p251 = scmp.eq.s32.totalorder %s22, 0
    %p252 = por %p250, %p251
    %p253 = scmp.ne.s32.totalorder %s239, %s240
    %p254 = scmp.eq.s32.totalorder %s23, 1
    %p255 = por %p253, %p254
    %p257 = scmp.ne.s32.totalorder %s240, %s256
    %p258 = scmp.eq.s32.totalorder %s23, 0
    %p259 = por %p257, %p258
    %s260 = ssub.s32 %s17, %s24
    %p261 = scmp.eq.s32.totalorder %s260, 0
    %s263 = sadd.s32 %s262, 1
    %s264 = scalar_select %p261, %s262, %s263
    %p267 = pneg %p261
    %p268 = scmp.eq.s32.totalorder %s17, 1
    %p269 = por %p267, %p268
    %p270 = scmp.ne.s32.totalorder %s262, %s265
    %p271 = scmp.eq.s32.totalorder %s17, 0
    %p272 = por %p270, %p271
    %p273 = scmp.ne.s32.totalorder %s262, %s265
    %p274 = scmp.eq.s32.totalorder %s22, 1
    %p275 = por %p273, %p274
    %p276 = scmp.ne.s32.totalorder %s265, %s266
    %p277 = scmp.eq.s32.totalorder %s22, 0
    %p278 = por %p276, %p277
    %p279 = scmp.ne.s32.totalorder %s265, %s266
    %p280 = scmp.eq.s32.totalorder %s23, 1
    %p281 = por %p279, %p280
    %p283 = scmp.ne.s32.totalorder %s266, %s282
    %p284 = scmp.eq.s32.totalorder %s23, 0
    %p285 = por %p283, %p284
    %p286 = scmp.le.s32.totalorder 1, %s17
    %p287 = scmp.lt.s32.totalorder %s17, 3
    %p288 = pnand %p286, %p287
    %p289 = pneg %p288
    // Predicated region
    $region9: #{bert_v1_0_forward.1} parent=5 // pred_check
      _
    $region10: #{bert_v1_0_forward.1} parent=5 // pred_check_branch
      %291 = sbr.rel (%p288) target = $region12
    $region11: #{bert_v1_0_forward.1} parent=5 // pred_region
      %s292 = ssub.s32 %s17, 1
      // Predicated region
      $region13: #{bert_v1_0_forward.1} parent=11 // pred_check
        %p293 = pneg %p90
      $region14: #{bert_v1_0_forward.1} parent=11 // pred_check_branch
        %295 = sbr.rel (%p293) target = $region16
      $region15: #{bert_v1_0_forward.1} parent=11 // pred_region
        _
      $region16: #{bert_v1_0_forward.1} parent=11 // pred_fallthru
        _
      // Predicated region
      $region17: #{bert_v1_0_forward.1} parent=11 // pred_check
        %p296 = pneg %p111
      $region18: #{bert_v1_0_forward.1} parent=11 // pred_check_branch
        %298 = sbr.rel (%p296) target = $region20
      $region19: #{bert_v1_0_forward.1} parent=11 // pred_region
        _
      $region20: #{bert_v1_0_forward.1} parent=11 // pred_fallthru
        _
      // Predicated region
      $region21: #{bert_v1_0_forward.1} parent=11 // pred_check
        %p299 = pneg %p132
      $region22: #{bert_v1_0_forward.1} parent=11 // pred_check_branch
        %301 = sbr.rel (%p299) target = $region24
      $region23: #{bert_v1_0_forward.1} parent=11 // pred_region
        _
      $region24: #{bert_v1_0_forward.1} parent=11 // pred_fallthru
        _
      // Predicated region
      $region25: #{bert_v1_0_forward.1} parent=11 // pred_check
        %p302 = pneg %p153
      $region26: #{bert_v1_0_forward.1} parent=11 // pred_check_branch
        %304 = sbr.rel (%p302) target = $region28
      $region27: #{bert_v1_0_forward.1} parent=11 // pred_region
        _
      $region28: #{bert_v1_0_forward.1} parent=11 // pred_fallthru
        _
      // Predicated region
      $region29: #{bert_v1_0_forward.1} parent=11 // pred_check
        %p305 = pneg %p174
      $region30: #{bert_v1_0_forward.1} parent=11 // pred_check_branch
        %307 = sbr.rel (%p305) target = $region32
      $region31: #{bert_v1_0_forward.1} parent=11 // pred_region
        _
      $region32: #{bert_v1_0_forward.1} parent=11 // pred_fallthru
        _
    $region12: #{bert_v1_0_forward.1} parent=5 // pred_fallthru
      _
    %p308 = scmp.lt.s32.totalorder %s17, 2
    // Predicated region
    $region33: #{bert_v1_0_forward.1} parent=5 // pred_check
      %p309 = pneg %p308
    $region34: #{bert_v1_0_forward.1} parent=5 // pred_check_branch
      %311 = sbr.rel (%p309) target = $region36
    $region35: #{bert_v1_0_forward.1} parent=5 // pred_region
      // Predicated region
      $region37: #{bert_v1_0_forward.1} parent=35 // pred_check
        %p312 = pneg %p37
      $region38: #{bert_v1_0_forward.1} parent=35 // pred_check_branch
        %314 = sbr.rel (%p312) target = $region40
      $region39: #{bert_v1_0_forward.1} parent=35 // pred_region
        %s315 = smul.u32 8, %s17
        %p316 = scmp.lt.s32.totalorder %s315, 15
        %s317 = scalar_select %p316, %s315, 15
        %s318 = smul.addr %s317, 8
        %s319 = scalar_lea.vmem %s0, %s318
        %s320 = smul.u32 8, %s17
      $region40: #{bert_v1_0_forward.1} parent=35 // pred_fallthru
        _
      // Predicated region
      $region41: #{bert_v1_0_forward.1} parent=35 // pred_check
        %p321 = pneg %p63
      $region42: #{bert_v1_0_forward.1} parent=35 // pred_check_branch
        %323 = sbr.rel (%p321) target = $region44
      $region43: #{bert_v1_0_forward.1} parent=35 // pred_region
        %s324 = smul.u32 8, %s17
        %p325 = scmp.lt.s32.totalorder %s324, 15
        %s326 = scalar_select %p325, %s324, 15
        %s327 = smul.addr %s326, 8
        %s328 = scalar_lea.vmem %s1, %s327
        %s329 = smul.u32 8, %s17
      $region44: #{bert_v1_0_forward.1} parent=35 // pred_fallthru
        _
    $region36: #{bert_v1_0_forward.1} parent=5 // pred_fallthru
      _
    %p330 = scmp.le.s32.totalorder 1, %s17
    %p331 = scmp.lt.s32.totalorder %s17, 3
    %p332 = pnand %p330, %p331
    %p333 = pneg %p332
    // Predicated region
    $region45: #{bert_v1_0_forward.1} parent=5 // pred_check
      _
    $region46: #{bert_v1_0_forward.1} parent=5 // pred_check_branch
      %335 = sbr.rel (%p332) target = $region48
    $region47: #{bert_v1_0_forward.1} parent=5 // pred_region
      %s336 = ssub.s32 %s17, 1
      %s337 = smul.u32 8, %s22
      %p338 = scmp.lt.s32.totalorder %s337, 15
      %s339 = scalar_select %p338, %s337, 15
      %s340 = smul.addr %s339, 8
      %s341 = scalar_lea.vmem %s0, %s340
      %p342 = pneg %p43
      %p343 = pneg %p40
      %s344 = smul.u32 8, %s22
      %p345 = scmp.lt.s32.totalorder %s344, 15
      %s346 = scalar_select %p345, %s344, 15
      %s347 = smul.addr %s346, 8
      %s348 = scalar_lea.vmem %s1, %s347
      %p349 = pneg %p69
      %p350 = pneg %p66
      %p351 = pneg %p90
      %p352 = pneg %p87
      %p353 = pneg %p111
      %p354 = pneg %p108
      %p355 = pneg %p132
      %p356 = pneg %p129
      %p357 = pneg %p153
      %p358 = pneg %p150
      %p359 = pneg %p174
      %p360 = pneg %p171
      %p361 = pneg %p200
      %p362 = pneg %p197
      %p363 = scmp.lt.s32.totalorder %s22, 1
      %s364 = scalar_select %p363, %s22, 1
      %s365 = smul.addr %s364, 8
      %s366 = scalar_lea.vmem %s7, %s365
      %p367 = pneg %p226
      %p368 = pneg %p223
      %p369 = scmp.lt.s32.totalorder %s22, 1
      %s370 = scalar_select %p369, %s22, 1
      %s371 = smul.addr %s370, 8
      %s372 = scalar_lea.vmem %s8, %s371
      %p373 = pneg %p252
      %p374 = pneg %p249
      %p375 = scmp.lt.s32.totalorder %s22, 1
      %s376 = scalar_select %p375, %s22, 1
      %s377 = smul.addr %s376, 8
      %s378 = scalar_lea.vmem %s9, %s377
      %p379 = pneg %p278
      %p380 = pneg %p275
      %p381 = scmp.lt.s32.totalorder %s22, 1
      %s382 = scalar_select %p381, %s22, 1
      %s383 = smul.addr %s382, 8
      %s384 = scalar_lea.vmem %s10, %s383
      %s385 = smul.u32 8, %s22
      %p386 = scmp.lt.s32.totalorder %s385, 15
      %s387 = scalar_select %p386, %s385, 15
      %s388 = smul.addr %s387, 8
      %s389 = scalar_lea.vmem %s0, %s388
      %s390 = smul.u32 8, %s22
      %s391 = smul.u32 8, %s22
      %p392 = scmp.lt.s32.totalorder %s391, 15
      %s393 = scalar_select %p392, %s391, 15
      %s394 = smul.addr %s393, 8
      %s395 = scalar_lea.vmem %s1, %s394
      %s396 = smul.u32 8, %s22
      %p397 = scmp.lt.s32.totalorder %s22, 1
      %s398 = scalar_select %p397, %s22, 1
      %s399 = smul.addr %s398, 8
      %s400 = scalar_lea.vmem %s7, %s399
      %p401 = scmp.lt.s32.totalorder %s22, 1
      %s402 = scalar_select %p401, %s22, 1
      %s403 = smul.addr %s402, 8
      %s404 = scalar_lea.vmem %s8, %s403
      %p405 = scmp.lt.s32.totalorder %s22, 1
      %s406 = scalar_select %p405, %s22, 1
      %s407 = smul.addr %s406, 8
      %s408 = scalar_lea.vmem %s9, %s407
      %p409 = scmp.lt.s32.totalorder %s22, 1
      %s410 = scalar_select %p409, %s22, 1
      %s411 = smul.addr %s410, 8
      %s412 = scalar_lea.vmem %s10, %s411
      %v413 = vld [vmem:[%s389] sm:$0xff]
      %v414 = vld [vmem:[%s389 + $0x8] sm:$0xff]
      %v415 = vld [vmem:[%s389 + $0x10] sm:$0xff]
      %v416 = vld [vmem:[%s389 + $0x18] sm:$0xff]
      %v417 = vld [vmem:[%s389 + $0x20] sm:$0xff]
      %v418 = vld [vmem:[%s389 + $0x28] sm:$0xff]
      %v419 = vld [vmem:[%s389 + $0x30] sm:$0xff]
      %v420 = vld [vmem:[%s389 + $0x38] sm:$0xff]
      %vm421 = vcmask 261120
      %v422 = vsel %vm421, %v413, 0.0
      %v423 = vrot.slane %v422, 4
      %v424 = vadd.f32 %v422, %v423
      %v425 = vrot.slane %v424, 2
      %v426 = vadd.f32 %v424, %v425
      %v427 = vrot.slane %v426, 1
      %v428 = vadd.f32 %v426, %v427
      %v429 = vsel %vm421, %v414, 0.0
      %v430 = vrot.slane %v429, 4
      %v431 = vadd.f32 %v429, %v430
      %v432 = vrot.slane %v431, 2
      %v433 = vadd.f32 %v431, %v432
      %v434 = vrot.slane %v433, 1
      %v435 = vadd.f32 %v433, %v434
      %v436 = vsel %vm421, %v415, 0.0
      %v437 = vrot.slane %v436, 4
      %v438 = vadd.f32 %v436, %v437
      %v439 = vrot.slane %v438, 2
      %v440 = vadd.f32 %v438, %v439
      %v441 = vrot.slane %v440, 1
      %v442 = vadd.f32 %v440, %v441
      %v443 = vsel %vm421, %v416, 0.0
      %v444 = vrot.slane %v443, 4
      %v445 = vadd.f32 %v443, %v444
      %v446 = vrot.slane %v445, 2
      %v447 = vadd.f32 %v445, %v446
      %v448 = vrot.slane %v447, 1
      %v449 = vadd.f32 %v447, %v448
      %v450 = vsel %vm421, %v417, 0.0
      %v451 = vrot.slane %v450, 4
      %v452 = vadd.f32 %v450, %v451
      %v453 = vrot.slane %v452, 2
      %v454 = vadd.f32 %v452, %v453
      %v455 = vrot.slane %v454, 1
      %v456 = vadd.f32 %v454, %v455
      %v457 = vsel %vm421, %v418, 0.0
      %v458 = vrot.slane %v457, 4
      %v459 = vadd.f32 %v457, %v458
      %v460 = vrot.slane %v459, 2
      %v461 = vadd.f32 %v459, %v460
      %v462 = vrot.slane %v461, 1
      %v463 = vadd.f32 %v461, %v462
      %v464 = vsel %vm421, %v419, 0.0
      %v465 = vrot.slane %v464, 4
      %v466 = vadd.f32 %v464, %v465
      %v467 = vrot.slane %v466, 2
      %v468 = vadd.f32 %v466, %v467
      %v469 = vrot.slane %v468, 1
      %v470 = vadd.f32 %v468, %v469
      %v471 = vsel %vm421, %v420, 0.0
      %v472 = vrot.slane %v471, 4
      %v473 = vadd.f32 %v471, %v472
      %v474 = vrot.slane %v473, 2
      %v475 = vadd.f32 %v473, %v474
      %v476 = vrot.slane %v475, 1
      %v477 = vadd.f32 %v475, %v476
      %v478 = vrcp.pop 8.0
      %v479 = vmul.f32 %v428, %v478
      %v480 = vmul.f32 %v435, %v478
      %v481 = vmul.f32 %v442, %v478
      %v482 = vmul.f32 %v449, %v478
      %v483 = vmul.f32 %v456, %v478
      %v484 = vmul.f32 %v463, %v478
      %v485 = vmul.f32 %v470, %v478
      %v486 = vmul.f32 %v477, %v478
      %v487 = vld [vmem:[%s395] sm:$0xff]
      %v488 = vld [vmem:[%s395 + $0x8] sm:$0xff]
      %v489 = vld [vmem:[%s395 + $0x10] sm:$0xff]
      %v490 = vld [vmem:[%s395 + $0x18] sm:$0xff]
      %v491 = vld [vmem:[%s395 + $0x20] sm:$0xff]
      %v492 = vld [vmem:[%s395 + $0x28] sm:$0xff]
      %v493 = vld [vmem:[%s395 + $0x30] sm:$0xff]
      %v494 = vld [vmem:[%s395 + $0x38] sm:$0xff]
      %v495 = vsel %vm421, %v487, 0.0
      %v496 = vrot.slane %v495, 4
      %v497 = vadd.f32 %v495, %v496
      %v498 = vrot.slane %v497, 2
      %v499 = vadd.f32 %v497, %v498
      %v500 = vrot.slane %v499, 1
      %v501 = vadd.f32 %v499, %v500
      %v502 = vsel %vm421, %v488, 0.0
      %v503 = vrot.slane %v502, 4
      %v504 = vadd.f32 %v502, %v503
      %v505 = vrot.slane %v504, 2
      %v506 = vadd.f32 %v504, %v505
      %v507 = vrot.slane %v506, 1
      %v508 = vadd.f32 %v506, %v507
      %v509 = vsel %vm421, %v489, 0.0
      %v510 = vrot.slane %v509, 4
      %v511 = vadd.f32 %v509, %v510
      %v512 = vrot.slane %v511, 2
      %v513 = vadd.f32 %v511, %v512
      %v514 = vrot.slane %v513, 1
      %v515 = vadd.f32 %v513, %v514
      %v516 = vsel %vm421, %v490, 0.0
      %v517 = vrot.slane %v516, 4
      %v518 = vadd.f32 %v516, %v517
      %v519 = vrot.slane %v518, 2
      %v520 = vadd.f32 %v518, %v519
      %v521 = vrot.slane %v520, 1
      %v522 = vadd.f32 %v520, %v521
      %v523 = vsel %vm421, %v491, 0.0
      %v524 = vrot.slane %v523, 4
      %v525 = vadd.f32 %v523, %v524
      %v526 = vrot.slane %v525, 2
      %v527 = vadd.f32 %v525, %v526
      %v528 = vrot.slane %v527, 1
      %v529 = vadd.f32 %v527, %v528
      %v530 = vsel %vm421, %v492, 0.0
      %v531 = vrot.slane %v530, 4
      %v532 = vadd.f32 %v530, %v531
      %v533 = vrot.slane %v532, 2
      %v534 = vadd.f32 %v532, %v533
      %v535 = vrot.slane %v534, 1
      %v536 = vadd.f32 %v534, %v535
      %v537 = vsel %vm421, %v493, 0.0
      %v538 = vrot.slane %v537, 4
      %v539 = vadd.f32 %v537, %v538
      %v540 = vrot.slane %v539, 2
      %v541 = vadd.f32 %v539, %v540
      %v542 = vrot.slane %v541, 1
      %v543 = vadd.f32 %v541, %v542
      %v544 = vsel %vm421, %v494, 0.0
      %v545 = vrot.slane %v544, 4
      %v546 = vadd.f32 %v544, %v545
      %v547 = vrot.slane %v546, 2
      %v548 = vadd.f32 %v546, %v547
      %v549 = vrot.slane %v548, 1
      %v550 = vadd.f32 %v548, %v549
      %v551 = vmul.f32 %v501, %v478
      %v552 = vmul.f32 %v508, %v478
      %v553 = vmul.f32 %v515, %v478
      %v554 = vmul.f32 %v522, %v478
      %v555 = vmul.f32 %v529, %v478
      %v556 = vmul.f32 %v536, %v478
      %v557 = vmul.f32 %v543, %v478
      %v558 = vmul.f32 %v550, %v478
      %v559 = vld [vmem:[%s2] sm:$0xff]
      %v560 = vld [vmem:[%s2 + $0x8] sm:$0xff]
      %v561 = vld [vmem:[%s2 + $0x10] sm:$0xff]
      %v562 = vld [vmem:[%s2 + $0x18] sm:$0xff]
      %v563 = vld [vmem:[%s3] sm:$0x1]
      %v565 = vlaneseq
      %v566 = vshrl.u32 %v565, 7
      %v567 = vsub.s32 0, %v566
      %v568 = vrot.slane %v563, %v567
      %vm578 = vcmask 1041409
      %v579 = vsel %vm578, %v480, %v479
      %vm580 = vcmask 1042434
      %v581 = vsel %vm580, %v481, %v579
      %vm582 = vcmask 1043459
      %v583 = vsel %vm582, %v482, %v581
      %vm584 = vcmask 1044484
      %v585 = vsel %vm584, %v483, %v583
      %vm586 = vcmask 1045509
      %v587 = vsel %vm586, %v484, %v585
      %vm588 = vcmask 1046534
      %v589 = vsel %vm588, %v485, %v587
      %vm590 = vcmask 1047559
      %v591 = vsel %vm590, %v486, %v589
      %v592 = vsel %vm421, %v591, 0
      %594 = vmatprep.subr.mxu0 0.0
      %595 = vmatpush1.msra.mxu0 0.0
      %596 = vmatprep.subr.mxu0 0.0
      %597 = vmatpush1.msra.mxu0 0.0
      %598 = vmatprep.subr.mxu0 0.0
      %599 = vmatpush1.msra.mxu0 0.0
      %600 = vmatprep.subr.mxu0 0.0
      %601 = vmatpush1.msra.mxu0 0.0
      %602 = vmatprep.subr.mxu0 0.0
      %603 = vmatpush1.msra.mxu0 0.0
      %604 = vmatprep.subr.mxu0 0.0
      %605 = vmatpush1.msra.mxu0 0.0
      %606 = vmatprep.subr.mxu0 0.0
      %607 = vmatpush1.msra.mxu0 0.0
      %608 = vmatprep.subr.mxu0 0.0
      %609 = vmatpush1.msra.mxu0 0.0
      %610 = vmatprep.subr.mxu0 0.0
      %611 = vmatpush1.msra.mxu0 0.0
      %612 = vmatprep.subr.mxu0 0.0
      %613 = vmatpush1.msra.mxu0 0.0
      %614 = vmatprep.subr.mxu0 0.0
      %615 = vmatpush1.msra.mxu0 0.0
      %616 = vmatprep.subr.mxu0 0.0
      %617 = vmatpush1.msra.mxu0 0.0
      %618 = vmatprep.subr.mxu0 0.0
      %619 = vmatpush1.msra.mxu0 %v562
      %620 = vmatprep.subr.mxu0 0.0
      %621 = vmatpush1.msra.mxu0 %v561
      %622 = vmatprep.subr.mxu0 0.0
      %623 = vmatpush1.msra.mxu0 %v560
      %624 = vmatprep.subr.mxu0 0.0
      %625 = vmatpush1.msra.mxu0 %v559
      %626 = vmatprep.subr.mxu0 0.0
      %627 = vmatpush2.msra.mxu0 0.0
      %628 = vmatprep.subr.mxu0 0.0
      %629 = vmatpush2.msra.mxu0 0.0
      %630 = vmatprep.subr.mxu0 0.0
      %631 = vmatpush2.msra.mxu0 0.0
      %632 = vmatprep.subr.mxu0 0.0
      %633 = vmatpush2.msra.mxu0 0.0
      %634 = vmatprep.subr.mxu0 0.0
      %635 = vmatpush2.msra.mxu0 0.0
      %636 = vmatprep.subr.mxu0 0.0
      %637 = vmatpush2.msra.mxu0 0.0
      %638 = vmatprep.subr.mxu0 0.0
      %639 = vmatpush2.msra.mxu0 0.0
      %640 = vmatprep.subr.mxu0 0.0
      %641 = vmatpush2.msra.mxu0 0.0
      %642 = vmatprep.subr.mxu0 0.0
      %643 = vmatpush2.msra.mxu0 0.0
      %644 = vmatprep.subr.mxu0 0.0
      %645 = vmatpush2.msra.mxu0 0.0
      %646 = vmatprep.subr.mxu0 0.0
      %647 = vmatpush2.msra.mxu0 0.0
      %648 = vmatprep.subr.mxu0 0.0
      %649 = vmatpush2.msra.mxu0 0.0
      %650 = vmatprep.subr.mxu0 0.0
      %651 = vmatpush2.msra.mxu0 0.0
      %652 = vmatprep.subr.mxu0 0.0
      %653 = vmatpush2.msra.mxu0 0.0
      %654 = vmatprep.subr.mxu0 0.0
      %655 = vmatpush2.msra.mxu0 0.0
      %656 = vmatprep.subr.mxu0 0.0
      %657 = vmatpush2.msra.mxu0 0.0
      %658 = vmatprep.mubr.f32.mxu0 0.0
      %659 = vmatmul.mubr.f32.gmra.mxu0 %v592
      %v660 = vpop.f32.mrf.mxu0
      %v661 = vadd.f32 %v568, %v660
      %v662 = vpop.f32.mrf.mxu0
      %663 = vdwg.mxu0
      %v664 = vld [vmem:[%s4] sm:$0xff]
      %v665 = vld [vmem:[%s4 + $0x8] sm:$0xff]
      %v666 = vld [vmem:[%s4 + $0x10] sm:$0xff]
      %v667 = vld [vmem:[%s4 + $0x18] sm:$0xff]
      %v668 = vld [vmem:[%s5] sm:$0xff]
      %v669 = vld [vmem:[%s5 + $0x8] sm:$0xff]
      %v670 = vld [vmem:[%s5 + $0x10] sm:$0xff]
      %v671 = vld [vmem:[%s5 + $0x18] sm:$0xff]
      %v680 = vsel %vm578, %v552, %v551
      %v681 = vsel %vm580, %v553, %v680
      %v682 = vsel %vm582, %v554, %v681
      %v683 = vsel %vm584, %v555, %v682
      %v684 = vsel %vm586, %v556, %v683
      %v685 = vsel %vm588, %v557, %v684
      %v686 = vsel %vm590, %v558, %v685
      %v687 = vsel %vm421, %v686, 0
      %689 = vmatprep.subr.mxu0 0.0
      %690 = vmatpush1.msra.mxu0 0.0
      %691 = vmatprep.subr.mxu0 0.0
      %692 = vmatpush1.msra.mxu0 0.0
      %693 = vmatprep.subr.mxu0 0.0
      %694 = vmatpush1.msra.mxu0 0.0
      %695 = vmatprep.subr.mxu0 0.0
      %696 = vmatpush1.msra.mxu0 0.0
      %697 = vmatprep.subr.mxu0 0.0
      %698 = vmatpush1.msra.mxu0 0.0
      %699 = vmatprep.subr.mxu0 0.0
      %700 = vmatpush1.msra.mxu0 0.0
      %701 = vmatprep.subr.mxu0 0.0
      %702 = vmatpush1.msra.mxu0 0.0
      %703 = vmatprep.subr.mxu0 0.0
      %704 = vmatpush1.msra.mxu0 0.0
      %705 = vmatprep.subr.mxu0 0.0
      %706 = vmatpush1.msra.mxu0 0.0
      %707 = vmatprep.subr.mxu0 0.0
      %708 = vmatpush1.msra.mxu0 0.0
      %709 = vmatprep.subr.mxu0 0.0
      %710 = vmatpush1.msra.mxu0 0.0
      %711 = vmatprep.subr.mxu0 0.0
      %712 = vmatpush1.msra.mxu0 0.0
      %713 = vmatprep.subr.mxu0 0.0
      %714 = vmatpush1.msra.mxu0 %v671
      %715 = vmatprep.subr.mxu0 0.0
      %716 = vmatpush1.msra.mxu0 %v670
      %717 = vmatprep.subr.mxu0 0.0
      %718 = vmatpush1.msra.mxu0 %v669
      %719 = vmatprep.subr.mxu0 0.0
      %720 = vmatpush1.msra.mxu0 %v668
      %721 = vmatprep.subr.mxu0 0.0
      %722 = vmatpush2.msra.mxu0 0.0
      %723 = vmatprep.subr.mxu0 0.0
      %724 = vmatpush2.msra.mxu0 0.0
      %725 = vmatprep.subr.mxu0 0.0
      %726 = vmatpush2.msra.mxu0 0.0
      %727 = vmatprep.subr.mxu0 0.0
      %728 = vmatpush2.msra.mxu0 0.0
      %729 = vmatprep.subr.mxu0 0.0
      %730 = vmatpush2.msra.mxu0 0.0
      %731 = vmatprep.subr.mxu0 0.0
      %732 = vmatpush2.msra.mxu0 0.0
      %733 = vmatprep.subr.mxu0 0.0
      %734 = vmatpush2.msra.mxu0 0.0
      %735 = vmatprep.subr.mxu0 0.0
      %736 = vmatpush2.msra.mxu0 0.0
      %737 = vmatprep.subr.mxu0 0.0
      %738 = vmatpush2.msra.mxu0 0.0
      %739 = vmatprep.subr.mxu0 0.0
      %740 = vmatpush2.msra.mxu0 0.0
      %741 = vmatprep.subr.mxu0 0.0
      %742 = vmatpush2.msra.mxu0 0.0
      %743 = vmatprep.subr.mxu0 0.0
      %744 = vmatpush2.msra.mxu0 0.0
      %745 = vmatprep.subr.mxu0 0.0
      %746 = vmatpush2.msra.mxu0 0.0
      %747 = vmatprep.subr.mxu0 0.0
      %748 = vmatpush2.msra.mxu0 0.0
      %749 = vmatprep.subr.mxu0 0.0
      %750 = vmatpush2.msra.mxu0 0.0
      %751 = vmatprep.subr.mxu0 0.0
      %752 = vmatpush2.msra.mxu0 0.0
      %753 = vmatprep.mubr.f32.mxu0 0.0
      %754 = vmatmul.mubr.f32.gmra.mxu0 %v687
      %v755 = vpop.f32.mrf.mxu0
      %v756 = vadd.f32 0.0, %v755
      %v757 = vpop.f32.mrf.mxu0
      %758 = vdwg.mxu0
      %759 = vmatprep.subr.mxu0 0.0
      %760 = vmatpush1.msra.mxu0 0.0
      %761 = vmatprep.subr.mxu0 0.0
      %762 = vmatpush1.msra.mxu0 0.0
      %763 = vmatprep.subr.mxu0 0.0
      %764 = vmatpush1.msra.mxu0 0.0
      %765 = vmatprep.subr.mxu0 0.0
      %766 = vmatpush1.msra.mxu0 0.0
      %767 = vmatprep.subr.mxu0 0.0
      %768 = vmatpush1.msra.mxu0 0.0
      %769 = vmatprep.subr.mxu0 0.0
      %770 = vmatpush1.msra.mxu0 0.0
      %771 = vmatprep.subr.mxu0 0.0
      %772 = vmatpush1.msra.mxu0 0.0
      %773 = vmatprep.subr.mxu0 0.0
      %774 = vmatpush1.msra.mxu0 0.0
      %775 = vmatprep.subr.mxu0 0.0
      %776 = vmatpush1.msra.mxu0 0.0
      %777 = vmatprep.subr.mxu0 0.0
      %778 = vmatpush1.msra.mxu0 0.0
      %779 = vmatprep.subr.mxu0 0.0
      %780 = vmatpush1.msra.mxu0 0.0
      %781 = vmatprep.subr.mxu0 0.0
      %782 = vmatpush1.msra.mxu0 0.0
      %783 = vmatprep.subr.mxu0 0.0
      %784 = vmatpush1.msra.mxu0 %v667
      %785 = vmatprep.subr.mxu0 0.0
      %786 = vmatpush1.msra.mxu0 %v666
      %787 = vmatprep.subr.mxu0 0.0
      %788 = vmatpush1.msra.mxu0 %v665
      %789 = vmatprep.subr.mxu0 0.0
      %790 = vmatpush1.msra.mxu0 %v664
      %791 = vmatprep.subr.mxu0 0.0
      %792 = vmatpush2.msra.mxu0 0.0
      %793 = vmatprep.subr.mxu0 0.0
      %794 = vmatpush2.msra.mxu0 0.0
      %795 = vmatprep.subr.mxu0 0.0
      %796 = vmatpush2.msra.mxu0 0.0
      %797 = vmatprep.subr.mxu0 0.0
      %798 = vmatpush2.msra.mxu0 0.0
      %799 = vmatprep.subr.mxu0 0.0
      %800 = vmatpush2.msra.mxu0 0.0
      %801 = vmatprep.subr.mxu0 0.0
      %802 = vmatpush2.msra.mxu0 0.0
      %803 = vmatprep.subr.mxu0 0.0
      %804 = vmatpush2.msra.mxu0 0.0
      %805 = vmatprep.subr.mxu0 0.0
      %806 = vmatpush2.msra.mxu0 0.0
      %807 = vmatprep.subr.mxu0 0.0
      %808 = vmatpush2.msra.mxu0 0.0
      %809 = vmatprep.subr.mxu0 0.0
      %810 = vmatpush2.msra.mxu0 0.0
      %811 = vmatprep.subr.mxu0 0.0
      %812 = vmatpush2.msra.mxu0 0.0
      %813 = vmatprep.subr.mxu0 0.0
      %814 = vmatpush2.msra.mxu0 0.0
      %815 = vmatprep.subr.mxu0 0.0
      %816 = vmatpush2.msra.mxu0 0.0
      %817 = vmatprep.subr.mxu0 0.0
      %818 = vmatpush2.msra.mxu0 0.0
      %819 = vmatprep.subr.mxu0 0.0
      %820 = vmatpush2.msra.mxu0 0.0
      %821 = vmatprep.subr.mxu0 0.0
      %822 = vmatpush2.msra.mxu0 0.0
      %823 = vmatprep.mubr.f32.mxu0 0.0
      %824 = vmatmul.mubr.f32.gmra.mxu0 %v592
      %v825 = vpop.f32.mrf.mxu0
      %v826 = vadd.f32 %v756, %v825
      %v827 = vpop.f32.mrf.mxu0
      %828 = vdwg.mxu0
      %v829 = vld [vmem:[%s6] sm:$0x1]
      %v831 = vlaneseq
      %v832 = vshrl.u32 %v831, 7
      %v833 = vsub.s32 0, %v832
      %v834 = vrot.slane %v829, %v833
      %v836 = vadd.f32 %v826, %v834
      %838 = vst.msk [vmem:[%s400] sm:$0xff] %vm421, %v591
      %840 = vst.msk [vmem:[%s404] sm:$0xff] %vm421, %v686
      %vm841 = vcmask 171008
      %842 = vst.msk [vmem:[%s408] sm:$0xff] %vm841, %v661
      %vm843 = vcmask 72704
      %844 = vst.msk [vmem:[%s412] sm:$0xff] %vm843, %v836
      %p845 = scmp.lt.s32.totalorder %s22, 1
      %s846 = scalar_select %p845, %s22, 1
      %s847 = smul.addr %s846, 8
      %s848 = scalar_lea.vmem %s7, %s847
      %p849 = scmp.lt.s32.totalorder %s22, 1
      %s850 = scalar_select %p849, %s22, 1
      %s851 = smul.addr %s850, 8
      %s852 = scalar_lea.vmem %s8, %s851
      %p853 = scmp.lt.s32.totalorder %s22, 1
      %s854 = scalar_select %p853, %s22, 1
      %s855 = smul.addr %s854, 8
      %s856 = scalar_lea.vmem %s9, %s855
      %p857 = scmp.lt.s32.totalorder %s22, 1
      %s858 = scalar_select %p857, %s22, 1
      %s859 = smul.addr %s858, 8
      %s860 = scalar_lea.vmem %s10, %s859
      // Predicated region
      $region49: #{bert_v1_0_forward.1} parent=47 // pred_check
        %p861 = pneg %p197
      $region50: #{bert_v1_0_forward.1} parent=47 // pred_check_branch
        %863 = sbr.rel (%p861) target = $region52
      $region51: #{bert_v1_0_forward.1} parent=47 // pred_region
        _
      $region52: #{bert_v1_0_forward.1} parent=47 // pred_fallthru
        _
      // Predicated region
      $region53: #{bert_v1_0_forward.1} parent=47 // pred_check
        %p864 = pneg %p223
      $region54: #{bert_v1_0_forward.1} parent=47 // pred_check_branch
        %866 = sbr.rel (%p864) target = $region56
      $region55: #{bert_v1_0_forward.1} parent=47 // pred_region
        _
      $region56: #{bert_v1_0_forward.1} parent=47 // pred_fallthru
        _
      // Predicated region
      $region57: #{bert_v1_0_forward.1} parent=47 // pred_check
        %p867 = pneg %p249
      $region58: #{bert_v1_0_forward.1} parent=47 // pred_check_branch
        %869 = sbr.rel (%p867) target = $region60
      $region59: #{bert_v1_0_forward.1} parent=47 // pred_region
        _
      $region60: #{bert_v1_0_forward.1} parent=47 // pred_fallthru
        _
      // Predicated region
      $region61: #{bert_v1_0_forward.1} parent=47 // pred_check
        %p870 = pneg %p275
      $region62: #{bert_v1_0_forward.1} parent=47 // pred_check_branch
        %872 = sbr.rel (%p870) target = $region64
      $region63: #{bert_v1_0_forward.1} parent=47 // pred_region
        _
      $region64: #{bert_v1_0_forward.1} parent=47 // pred_fallthru
        _
    $region48: #{bert_v1_0_forward.1} parent=5 // pred_fallthru
      _
    %p873 = scmp.le.s32.totalorder 2, %s17
    // Predicated region
    $region65: #{bert_v1_0_forward.1} parent=5 // pred_check
      %p874 = pneg %p873
    $region66: #{bert_v1_0_forward.1} parent=5 // pred_check_branch
      %876 = sbr.rel (%p874) target = $region68
    $region67: #{bert_v1_0_forward.1} parent=5 // pred_region
      %s877 = ssub.s32 %s17, 2
      // Predicated region
      $region69: #{bert_v1_0_forward.1} parent=67 // pred_check
        %p878 = pneg %p203
      $region70: #{bert_v1_0_forward.1} parent=67 // pred_check_branch
        %880 = sbr.rel (%p878) target = $region72
      $region71: #{bert_v1_0_forward.1} parent=67 // pred_region
        %p881 = scmp.lt.s32.totalorder %s23, 1
        %s882 = scalar_select %p881, %s23, 1
        %s883 = smul.addr %s882, 8
        %s884 = scalar_lea.vmem %s7, %s883
      $region72: #{bert_v1_0_forward.1} parent=67 // pred_fallthru
        _
      // Predicated region
      $region73: #{bert_v1_0_forward.1} parent=67 // pred_check
        %p885 = pneg %p229
      $region74: #{bert_v1_0_forward.1} parent=67 // pred_check_branch
        %887 = sbr.rel (%p885) target = $region76
      $region75: #{bert_v1_0_forward.1} parent=67 // pred_region
        %p888 = scmp.lt.s32.totalorder %s23, 1
        %s889 = scalar_select %p888, %s23, 1
        %s890 = smul.addr %s889, 8
        %s891 = scalar_lea.vmem %s8, %s890
      $region76: #{bert_v1_0_forward.1} parent=67 // pred_fallthru
        _
      // Predicated region
      $region77: #{bert_v1_0_forward.1} parent=67 // pred_check
        %p892 = pneg %p255
      $region78: #{bert_v1_0_forward.1} parent=67 // pred_check_branch
        %894 = sbr.rel (%p892) target = $region80
      $region79: #{bert_v1_0_forward.1} parent=67 // pred_region
        %p895 = scmp.lt.s32.totalorder %s23, 1
        %s896 = scalar_select %p895, %s23, 1
        %s897 = smul.addr %s896, 8
        %s898 = scalar_lea.vmem %s9, %s897
      $region80: #{bert_v1_0_forward.1} parent=67 // pred_fallthru
        _
      // Predicated region
      $region81: #{bert_v1_0_forward.1} parent=67 // pred_check
        %p899 = pneg %p281
      $region82: #{bert_v1_0_forward.1} parent=67 // pred_check_branch
        %901 = sbr.rel (%p899) target = $region84
      $region83: #{bert_v1_0_forward.1} parent=67 // pred_region
        %p902 = scmp.lt.s32.totalorder %s23, 1
        %s903 = scalar_select %p902, %s23, 1
        %s904 = smul.addr %s903, 8
        %s905 = scalar_lea.vmem %s10, %s904
      $region84: #{bert_v1_0_forward.1} parent=67 // pred_fallthru
        _
    $region68: #{bert_v1_0_forward.1} parent=5 // pred_fallthru
      _
  $region6: #{bert_v1_0_forward.1} parent=0 // loop_footer
    %s21 = sadd.s32 1, %s17
  $region7: #{bert_v1_0_forward.1} parent=0 // loop_footer_branch
    %16 = sbr.rel target = $region3
  $region8: #{bert_v1_0_forward.1} parent=0 // loop_exit
    _

</llo_original>
